<compile_context>
chip_gen: v6e
topology: v6e:2x2x1
jax: 0.10.0
libtpu: 0.0.40
codegen_flags: <defaults>
</compile_context>

<pallas_src>
import functools

import jax
import jax.numpy as jnp
from jax.experimental import pallas as pl
from jax.experimental.pallas import tpu as pltpu


def _fused_residual_kernel(x_ref, m_ref, w1_ref, b1_ref, w2_ref, b2_ref, o_ref,
                           *, H, W, use_residual, mm_dtype):
    """grid = (num_batch_blocks, num_repeats); one inner step == one repeat.

    Layout: channels on sublanes, flattened (n, y, x) spatial on lanes.
      x_ref  : (C, P)             input activation block (read at r == 0)
      m_ref  : (9, 1, P)          precomputed 0/1 boundary mask per 3x3 tap
      w1_ref : (1, C2p, C)        1x1 conv weight (BN scale folded), padded out-ch
      b1_ref : (1, C2p, 1)        BN shift after conv1
      w2_ref : (1, 3, C, 3*C2p)   3x3 conv weight (BN scale folded), grouped by dy
      b2_ref : (1, C, 1)          BN shift after conv2
      o_ref  : (C, P)             output block; resident accumulator over repeats
    """
    r = pl.program_id(1)
    P = o_ref.shape[1]

    @pl.when(r == 0)
    def _():
        o_ref[...] = x_ref[...]

    x = o_ref[...]                                                   # (C, P)
    xf = x.astype(jnp.float32)

    # ---- conv 1x1 (C -> C2, BN scale folded into w1) + bias + LeakyReLU ----
    h = jnp.dot(w1_ref[0], x.astype(mm_dtype),
                preferred_element_type=jnp.float32)                  # (C2p, P)
    h = h + b1_ref[0]
    h = jnp.maximum(h, 0.1 * h)

    # ---- conv 3x3 pad=1 (C2 -> C): 3 matmuls (one per dy), f32 accumulate ---
    # Output lane p = n*H*W + y*W + x; tap (dy, dx) reads h at p + dy*W + dx.
    # Precomputed masks zero taps that would leave the image (roll wrap-around
    # / row crossings land on masked taps, so no padded spatial scratch).
    acc = None
    for iy, dy in enumerate((-1, 0, 1)):
        wins = []
        for ix, dx in enumerate((-1, 0, 1)):
            d = dy * W + dx
            win = h if d == 0 else pltpu.roll(h, (-d) % P, axis=1)
            if d != 0:
                win = win * m_ref[iy * 3 + ix]                       # (1, P) mask
            wins.append(win)
        grp = jnp.concatenate(wins, axis=0).astype(mm_dtype)         # (3*C2p, P)
        part = jnp.dot(w2_ref[0, iy], grp,
                       preferred_element_type=jnp.float32)           # (C, P)
        acc = part if acc is None else acc + part

    y = acc + b2_ref[0]
    y = jnp.maximum(y, 0.1 * y)

    new = xf + y if use_residual else y
    o_ref[...] = new.astype(o_ref.dtype)


def _pack_params(params, C, C2, C2p, mm_dtype):
    """Per-repeat weights in the kernel layout, BN scales folded into weights."""
    padr = C2p - C2
    W1s, B1s, W2s, B2s = [], [], [], []
    for (w1, s1, b1, w2, s2, b2) in params:
        w1k = jnp.pad(s1[:, None] * w1.T, ((0, padr), (0, 0)))        # (C2p, C)
        b1k = jnp.pad(b1[:, None], ((0, padr), (0, 0)))               # (C2p, 1)
        w2s = w2 * s2[None, None, None, :]                            # (3,3,C2,C)
        w2p = jnp.pad(w2s, ((0, 0), (0, 0), (0, padr), (0, 0)))       # (3,3,C2p,C)
        w2k = jnp.transpose(w2p, (0, 3, 1, 2)).reshape(3, C, 3 * C2p)  # (3,C,3*C2p)
        W1s.append(w1k.astype(mm_dtype))
        B1s.append(b1k)
        W2s.append(w2k.astype(mm_dtype))
        B2s.append(b2[:, None])                                       # (C, 1)
    return (jnp.stack(W1s), jnp.stack(B1s), jnp.stack(W2s), jnp.stack(B2s))


def _build_tap_masks(H, W, P_blk):
    """(9, 1, P_blk) 0/1 masks: tap (dy, dx) valid iff it stays inside the image."""
    p = jnp.arange(P_blk, dtype=jnp.int32)
    col = p % W
    row = (p // W) % H
    rows = []
    for dy in (-1, 0, 1):
        for dx in (-1, 0, 1):
            ok = jnp.ones((P_blk,), jnp.bool_)
            if dy == -1:
                ok = ok & (row >= 1)
            elif dy == 1:
                ok = ok & (row <= H - 2)
            if dx == -1:
                ok = ok & (col >= 1)
            elif dx == 1:
                ok = ok & (col <= W - 2)
            rows.append(ok.astype(jnp.float32))
    return jnp.stack(rows).reshape(9, 1, P_blk)


def _vmem_limit_bytes(C, C2p, P_blk):
    f = 4
    blocks = 2 * 2 * C * P_blk * f                     # x + o blocks (buffered)
    masks = 9 * P_blk * f
    weights = 2 * (C2p * C + C2p + 3 * C * 3 * C2p + C) * f
    temps = (2 * C2p + 3 * C2p + 2 * C) * P_blk * f    # h, windows, grp, acc
    est = blocks + masks + weights + temps
    return int(min(max(2 * est, 32 * 1024 * 1024), 64 * 1024 * 1024))


@functools.partial(jax.jit, static_argnames=("use_residual", "matmul_dtype"))
def residual_block_pallas(x_nchw, params, use_residual=True,
                          matmul_dtype=jnp.float32):
    """Fused forward pass. x_nchw: (N, C, H, W), like the PyTorch module."""
    N, C, H, W = x_nchw.shape
    C2 = C // 2
    C2p = ((C2 + 7) // 8) * 8           # pad conv1 output channels to sublane tile
    R = len(params)
    P_total = N * H * W

    # Batch-block "parallel" axis (whole images per block, lane-multiple width)
    # so the second TensorCore on v7x gets work. Otherwise pad P to 128 lanes.
    # TODO(synk): at real YOLO sizes pick more blocks per core count / VMEM budget.
    NB = 2 if (N % 2 == 0 and ((N // 2) * H * W) % 128 == 0) else 1

    x2d = jnp.transpose(x_nchw, (1, 0, 2, 3)).reshape(C, P_total)
    if NB == 1:
        P_pad = ((P_total + 127) // 128) * 128
        if P_pad != P_total:
            # Pad lanes are never read by valid lanes: the tap masks only allow
            # same-image reads, so roll wrap into the pad region is masked.
            x2d = jnp.pad(x2d, ((0, 0), (0, P_pad - P_total)))
    else:
        P_pad = P_total
    P_blk = P_pad // NB

    masks = _build_tap_masks(H, W, P_blk)
    W1s, B1s, W2s, B2s = _pack_params(params, C, C2, C2p, matmul_dtype)

    kernel = functools.partial(_fused_residual_kernel, H=H, W=W,
                               use_residual=use_residual, mm_dtype=matmul_dtype)
    out2d = pl.pallas_call(
        kernel,
        out_shape=jax.ShapeDtypeStruct((C, P_pad), x_nchw.dtype),
        grid_spec=pltpu.PrefetchScalarGridSpec(
            num_scalar_prefetch=0,
            grid=(NB, R),
            in_specs=[
                pl.BlockSpec((C, P_blk), lambda nb, r: (0, nb)),
                pl.BlockSpec((9, 1, P_blk), lambda nb, r: (0, 0, 0)),
                pl.BlockSpec((1, C2p, C), lambda nb, r: (r, 0, 0)),
                pl.BlockSpec((1, C2p, 1), lambda nb, r: (r, 0, 0)),
                pl.BlockSpec((1, 3, C, 3 * C2p), lambda nb, r: (r, 0, 0, 0)),
                pl.BlockSpec((1, C, 1), lambda nb, r: (r, 0, 0)),
            ],
            out_specs=pl.BlockSpec((C, P_blk), lambda nb, r: (0, nb)),
        ),
        compiler_params=pltpu.CompilerParams(
            dimension_semantics=("parallel", "arbitrary"),
            vmem_limit_bytes=_vmem_limit_bytes(C, C2p, P_blk)),
        input_output_aliases={0: 0},
    )(x2d, masks, W1s, B1s, W2s, B2s)

    out2d = out2d[:, :P_total]
    return jnp.transpose(out2d.reshape(C, N, H, W), (1, 0, 2, 3))


def make_params(key, channels, num_repeats):
    """Deterministic synthetic parameters; BN in eval mode (mean=0, var=1)."""
    C, C2, eps = channels, channels // 2, 1e-5
    params = []
    for _ in range(num_repeats):
        key, *ks = jax.random.split(key, 7)
        w1 = 0.1 * jax.random.normal(ks[0], (C, C2), jnp.float32)
        g1 = jax.random.uniform(ks[1], (C2,), jnp.float32, 0.5, 1.5)
        be1 = 0.1 * jax.random.normal(ks[2], (C2,), jnp.float32)
        w2 = 0.05 * jax.random.normal(ks[3], (3, 3, C2, C), jnp.float32)
        g2 = jax.random.uniform(ks[4], (C,), jnp.float32, 0.5, 1.5)
        be2 = 0.1 * jax.random.normal(ks[5], (C,), jnp.float32)
        s1 = g1 / jnp.sqrt(1.0 + eps)   # running_mean = 0, running_var = 1
        s2 = g2 / jnp.sqrt(1.0 + eps)
        params.append((w1, s1, be1, w2, s2, be2))
    return params


def residual_block_reference(x_nhwc, params, *, use_residual=True):
    """Pure-JAX reference (lax conv, NHWC) for correctness checking."""
    dn = jax.lax.conv_dimension_numbers(x_nhwc.shape, (1, 1, 1, 1),
                                        ('NHWC', 'HWIO', 'NHWC'))
    out = x_nhwc
    for (w1, s1, b1, w2, s2, b2) in params:
        h = jax.lax.conv_general_dilated(out, w1[None, None], (1, 1), 'VALID',
                                         dimension_numbers=dn)
        h = h * s1 + b1
        h = jnp.where(h > 0, h, 0.1 * h)
        y = jax.lax.conv_general_dilated(h, w2, (1, 1), ((1, 1), (1, 1)),
                                         dimension_numbers=dn)
        y = y * s2 + b2
        y = jnp.where(y > 0, y, 0.1 * y)
        out = out + y if use_residual else y
    return out


if __name__ == "__main__":
    N, C, H, W = 2, 8, 16, 16       # PyTorch NCHW input shape (2, 8, 16, 16)
    num_repeats = 2
    use_residual = True

    key = jax.random.PRNGKey(0)
    key, xk = jax.random.split(key)
    x_nchw = jax.random.normal(xk, (N, C, H, W), jnp.float32)
    params = make_params(key, C, num_repeats)

    # f32 MXU operands by default to hold the strict tolerance; pass
    # matmul_dtype=jnp.bfloat16 for the higher-throughput MXU path (relax tol).
    out_nchw = residual_block_pallas(x_nchw, params, use_residual=use_residual)
    jax.block_until_ready(out_nchw)

    x_nhwc = jnp.transpose(x_nchw, (0, 2, 3, 1))
    ref_nhwc = residual_block_reference(x_nhwc, params,
                                        use_residual=use_residual)
    ref_nchw = jnp.transpose(ref_nhwc, (0, 3, 1, 2))

    assert out_nchw.shape == (N, C, H, W)
    assert jnp.allclose(out_nchw, ref_nchw, atol=1e-4, rtol=1e-4), \
        "Pallas output does not match JAX reference"

    print("KERNEL_OK")
</pallas_src>

<mosaic_0001>
module attributes {stable_mosaic.version = 11 : i64} {
  func.func @_fused_residual_kernel(%arg0: i32, %arg1: i32, %arg2: memref<8x256xf32, #tpu.memory_space<vmem>>, %arg3: memref<9x1x256xf32, #tpu.memory_space<vmem>>, %arg4: memref<1x8x8xf32, #tpu.memory_space<vmem>>, %arg5: memref<1x8x1xf32, #tpu.memory_space<vmem>>, %arg6: memref<1x3x8x24xf32, #tpu.memory_space<vmem>>, %arg7: memref<1x8x1xf32, #tpu.memory_space<vmem>>, %arg8: memref<8x256xf32, #tpu.memory_space<vmem>>) attributes {dimension_semantics = [#tpu.dimension_semantics<parallel>, #tpu.dimension_semantics<arbitrary>], iteration_bounds = array<i64: 2, 2>, scalar_prefetch = 0 : i64, scratch_operands = 0 : i64, tpu.core_type = #tpu.core_type<tc>, window_params = [{transform_indices = @transform_0, window_bounds = array<i64: 8, 256>}, {pipeline_mode = #tpu.pipeline_mode<synchronous>, transform_indices = @transform_1, window_bounds = array<i64: 9, 1, 256>}, {transform_indices = @transform_2, window_bounds = array<i64: 1, 8, 8>}, {transform_indices = @transform_3, window_bounds = array<i64: 1, 8, 1>}, {transform_indices = @transform_4, window_bounds = array<i64: 1, 3, 8, 24>}, {transform_indices = @transform_5, window_bounds = array<i64: 1, 8, 1>}, {transform_indices = @transform_6, window_bounds = array<i64: 8, 256>}]} {
    %c0_i32 = arith.constant 0 : i32
    %0 = arith.cmpi eq, %arg1, %c0_i32 : i32
    %1 = arith.extui %0 : i1 to i32
    %c0_i32_0 = arith.constant 0 : i32
    %2 = arith.cmpi ne, %1, %c0_i32_0 : i32
    scf.if %2 {
      %c0_47 = arith.constant 0 : index
      %c0_48 = arith.constant 0 : index
      %77 = vector.load %arg2[%c0_47, %c0_48] : memref<8x256xf32, #tpu.memory_space<vmem>>, vector<8x256xf32>
      %c0_49 = arith.constant 0 : index
      %c0_50 = arith.constant 0 : index
      %78 = vector.load %arg8[%c0_49, %c0_50] : memref<8x256xf32, #tpu.memory_space<vmem>>, vector<8x256xf32>
      tpu.vector_store %arg8[%c0_49, %c0_50], %77 {strides = array<i32>} : memref<8x256xf32, #tpu.memory_space<vmem>>, vector<8x256xf32>,
    } else {
    }
    %c0 = arith.constant 0 : index
    %c0_1 = arith.constant 0 : index
    %3 = vector.load %arg8[%c0, %c0_1] : memref<8x256xf32, #tpu.memory_space<vmem>>, vector<8x256xf32>
    %c0_2 = arith.constant 0 : index
    %c0_3 = arith.constant 0 : index
    %c0_4 = arith.constant 0 : index
    %4 = vector.load %arg4[%c0_2, %c0_3, %c0_4] : memref<1x8x8xf32, #tpu.memory_space<vmem>>, vector<1x8x8xf32>
    %5 = vector.shape_cast %4 : vector<1x8x8xf32> to vector<8x8xf32>
    %cst = arith.constant dense<0.000000e+00> : vector<8x256xf32>
    %6 = tpu.matmul %5, %3, %cst {dimension_numbers = #tpu.dot_dimension_numbers<[1], [0], [0], [1], [0, 0, 1, 1], [], []>} : vector<8x8xf32>, vector<8x256xf32>, vector<8x256xf32> -> vector<8x256xf32>
    %c0_5 = arith.constant 0 : index
    %c0_6 = arith.constant 0 : index
    %c0_7 = arith.constant 0 : index
    %7 = vector.load %arg5[%c0_5, %c0_6, %c0_7] : memref<1x8x1xf32, #tpu.memory_space<vmem>>, vector<1x8x1xf32>
    %8 = vector.shape_cast %7 : vector<1x8x1xf32> to vector<8x1xf32>
    %9 = vector.broadcast %8 : vector<8x1xf32> to vector<8x256xf32>
    %10 = arith.addf %6, %9 : vector<8x256xf32>
    %cst_8 = arith.constant 1.000000e-01 : f32
    %11 = vector.broadcast %cst_8 : f32 to vector<8x256xf32>
    %12 = arith.mulf %11, %10 : vector<8x256xf32>
    %13 = arith.maximumf %10, %12 : vector<8x256xf32>
    %c17_i32 = arith.constant 17 : i32
    %14 = tpu.dynamic_rotate %13 by %c17_i32 dim 1 : vector<8x256xf32>, i32 -> vector<8x256xf32>
    %c0_9 = arith.constant 0 : index
    %c0_10 = arith.constant 0 : index
    %c0_11 = arith.constant 0 : index
    %15 = vector.load %arg3[%c0_9, %c0_10, %c0_11] : memref<9x1x256xf32, #tpu.memory_space<vmem>>, vector<1x1x256xf32>
    %16 = vector.shape_cast %15 : vector<1x1x256xf32> to vector<1x256xf32>
    %17 = vector.broadcast %16 : vector<1x256xf32> to vector<8x256xf32>
    %18 = arith.mulf %14, %17 : vector<8x256xf32>
    %c16_i32 = arith.constant 16 : i32
    %19 = tpu.dynamic_rotate %13 by %c16_i32 dim 1 : vector<8x256xf32>, i32 -> vector<8x256xf32>
    %c1 = arith.constant 1 : index
    %c0_12 = arith.constant 0 : index
    %c0_13 = arith.constant 0 : index
    %20 = vector.load %arg3[%c1, %c0_12, %c0_13] : memref<9x1x256xf32, #tpu.memory_space<vmem>>, vector<1x1x256xf32>
    %21 = vector.shape_cast %20 : vector<1x1x256xf32> to vector<1x256xf32>
    %22 = vector.broadcast %21 : vector<1x256xf32> to vector<8x256xf32>
    %23 = arith.mulf %19, %22 : vector<8x256xf32>
    %c15_i32 = arith.constant 15 : i32
    %24 = tpu.dynamic_rotate %13 by %c15_i32 dim 1 : vector<8x256xf32>, i32 -> vector<8x256xf32>
    %c2 = arith.constant 2 : index
    %c0_14 = arith.constant 0 : index
    %c0_15 = arith.constant 0 : index
    %25 = vector.load %arg3[%c2, %c0_14, %c0_15] : memref<9x1x256xf32, #tpu.memory_space<vmem>>, vector<1x1x256xf32>
    %26 = vector.shape_cast %25 : vector<1x1x256xf32> to vector<1x256xf32>
    %27 = vector.broadcast %26 : vector<1x256xf32> to vector<8x256xf32>
    %28 = arith.mulf %24, %27 : vector<8x256xf32>
    %29 = tpu.concatenate %18, %23, %28 in 0 : vector<8x256xf32>, vector<8x256xf32>, vector<8x256xf32> -> vector<24x256xf32>
    %c0_16 = arith.constant 0 : index
    %c0_17 = arith.constant 0 : index
    %c0_18 = arith.constant 0 : index
    %c0_19 = arith.constant 0 : index
    %30 = vector.load %arg6[%c0_16, %c0_17, %c0_18, %c0_19] : memref<1x3x8x24xf32, #tpu.memory_space<vmem>>, vector<1x1x8x24xf32>
    %31 = vector.shape_cast %30 : vector<1x1x8x24xf32> to vector<8x24xf32>
    %cst_20 = arith.constant dense<0.000000e+00> : vector<8x256xf32>
    %32 = tpu.matmul %31, %29, %cst_20 {dimension_numbers = #tpu.dot_dimension_numbers<[1], [0], [0], [1], [0, 0, 1, 1], [], []>} : vector<8x24xf32>, vector<24x256xf32>, vector<8x256xf32> -> vector<8x256xf32>
    %c1_i32 = arith.constant 1 : i32
    %33 = tpu.dynamic_rotate %13 by %c1_i32 dim 1 : vector<8x256xf32>, i32 -> vector<8x256xf32>
    %c3 = arith.constant 3 : index
    %c0_21 = arith.constant 0 : index
    %c0_22 = arith.constant 0 : index
    %34 = vector.load %arg3[%c3, %c0_21, %c0_22] : memref<9x1x256xf32, #tpu.memory_space<vmem>>, vector<1x1x256xf32>
    %35 = vector.shape_cast %34 : vector<1x1x256xf32> to vector<1x256xf32>
    %36 = vector.broadcast %35 : vector<1x256xf32> to vector<8x256xf32>
    %37 = arith.mulf %33, %36 : vector<8x256xf32>
    %c255_i32 = arith.constant 255 : i32
    %38 = tpu.dynamic_rotate %13 by %c255_i32 dim 1 : vector<8x256xf32>, i32 -> vector<8x256xf32>
    %c5 = arith.constant 5 : index
    %c0_23 = arith.constant 0 : index
    %c0_24 = arith.constant 0 : index
    %39 = vector.load %arg3[%c5, %c0_23, %c0_24] : memref<9x1x256xf32, #tpu.memory_space<vmem>>, vector<1x1x256xf32>
    %40 = vector.shape_cast %39 : vector<1x1x256xf32> to vector<1x256xf32>
    %41 = vector.broadcast %40 : vector<1x256xf32> to vector<8x256xf32>
    %42 = arith.mulf %38, %41 : vector<8x256xf32>
    %43 = tpu.concatenate %37, %13, %42 in 0 : vector<8x256xf32>, vector<8x256xf32>, vector<8x256xf32> -> vector<24x256xf32>
    %c0_25 = arith.constant 0 : index
    %c1_26 = arith.constant 1 : index
    %c0_27 = arith.constant 0 : index
    %c0_28 = arith.constant 0 : index
    %44 = vector.load %arg6[%c0_25, %c1_26, %c0_27, %c0_28] : memref<1x3x8x24xf32, #tpu.memory_space<vmem>>, vector<1x1x8x24xf32>
    %45 = vector.shape_cast %44 : vector<1x1x8x24xf32> to vector<8x24xf32>
    %cst_29 = arith.constant dense<0.000000e+00> : vector<8x256xf32>
    %46 = tpu.matmul %45, %43, %cst_29 {dimension_numbers = #tpu.dot_dimension_numbers<[1], [0], [0], [1], [0, 0, 1, 1], [], []>} : vector<8x24xf32>, vector<24x256xf32>, vector<8x256xf32> -> vector<8x256xf32>
    %47 = arith.addf %32, %46 : vector<8x256xf32>
    %c241_i32 = arith.constant 241 : i32
    %48 = tpu.dynamic_rotate %13 by %c241_i32 dim 1 : vector<8x256xf32>, i32 -> vector<8x256xf32>
    %c6 = arith.constant 6 : index
    %c0_30 = arith.constant 0 : index
    %c0_31 = arith.constant 0 : index
    %49 = vector.load %arg3[%c6, %c0_30, %c0_31] : memref<9x1x256xf32, #tpu.memory_space<vmem>>, vector<1x1x256xf32>
    %50 = vector.shape_cast %49 : vector<1x1x256xf32> to vector<1x256xf32>
    %51 = vector.broadcast %50 : vector<1x256xf32> to vector<8x256xf32>
    %52 = arith.mulf %48, %51 : vector<8x256xf32>
    %c240_i32 = arith.constant 240 : i32
    %53 = tpu.dynamic_rotate %13 by %c240_i32 dim 1 : vector<8x256xf32>, i32 -> vector<8x256xf32>
    %c7 = arith.constant 7 : index
    %c0_32 = arith.constant 0 : index
    %c0_33 = arith.constant 0 : index
    %54 = vector.load %arg3[%c7, %c0_32, %c0_33] : memref<9x1x256xf32, #tpu.memory_space<vmem>>, vector<1x1x256xf32>
    %55 = vector.shape_cast %54 : vector<1x1x256xf32> to vector<1x256xf32>
    %56 = vector.broadcast %55 : vector<1x256xf32> to vector<8x256xf32>
    %57 = arith.mulf %53, %56 : vector<8x256xf32>
    %c239_i32 = arith.constant 239 : i32
    %58 = tpu.dynamic_rotate %13 by %c239_i32 dim 1 : vector<8x256xf32>, i32 -> vector<8x256xf32>
    %c8 = arith.constant 8 : index
    %c0_34 = arith.constant 0 : index
    %c0_35 = arith.constant 0 : index
    %59 = vector.load %arg3[%c8, %c0_34, %c0_35] : memref<9x1x256xf32, #tpu.memory_space<vmem>>, vector<1x1x256xf32>
    %60 = vector.shape_cast %59 : vector<1x1x256xf32> to vector<1x256xf32>
    %61 = vector.broadcast %60 : vector<1x256xf32> to vector<8x256xf32>
    %62 = arith.mulf %58, %61 : vector<8x256xf32>
    %63 = tpu.concatenate %52, %57, %62 in 0 : vector<8x256xf32>, vector<8x256xf32>, vector<8x256xf32> -> vector<24x256xf32>
    %c0_36 = arith.constant 0 : index
    %c2_37 = arith.constant 2 : index
    %c0_38 = arith.constant 0 : index
    %c0_39 = arith.constant 0 : index
    %64 = vector.load %arg6[%c0_36, %c2_37, %c0_38, %c0_39] : memref<1x3x8x24xf32, #tpu.memory_space<vmem>>, vector<1x1x8x24xf32>
    %65 = vector.shape_cast %64 : vector<1x1x8x24xf32> to vector<8x24xf32>
    %cst_40 = arith.constant dense<0.000000e+00> : vector<8x256xf32>
    %66 = tpu.matmul %65, %63, %cst_40 {dimension_numbers = #tpu.dot_dimension_numbers<[1], [0], [0], [1], [0, 0, 1, 1], [], []>} : vector<8x24xf32>, vector<24x256xf32>, vector<8x256xf32> -> vector<8x256xf32>
    %67 = arith.addf %47, %66 : vector<8x256xf32>
    %c0_41 = arith.constant 0 : index
    %c0_42 = arith.constant 0 : index
    %c0_43 = arith.constant 0 : index
    %68 = vector.load %arg7[%c0_41, %c0_42, %c0_43] : memref<1x8x1xf32, #tpu.memory_space<vmem>>, vector<1x8x1xf32>
    %69 = vector.shape_cast %68 : vector<1x8x1xf32> to vector<8x1xf32>
    %70 = vector.broadcast %69 : vector<8x1xf32> to vector<8x256xf32>
    %71 = arith.addf %67, %70 : vector<8x256xf32>
    %cst_44 = arith.constant 1.000000e-01 : f32
    %72 = vector.broadcast %cst_44 : f32 to vector<8x256xf32>
    %73 = arith.mulf %72, %71 : vector<8x256xf32>
    %74 = arith.maximumf %71, %73 : vector<8x256xf32>
    %75 = arith.addf %3, %74 : vector<8x256xf32>
    %c0_45 = arith.constant 0 : index
    %c0_46 = arith.constant 0 : index
    %76 = vector.load %arg8[%c0_45, %c0_46] : memref<8x256xf32, #tpu.memory_space<vmem>>, vector<8x256xf32>
    tpu.vector_store %arg8[%c0_45, %c0_46], %75 {strides = array<i32>} : memref<8x256xf32, #tpu.memory_space<vmem>>, vector<8x256xf32>,
    return
  }
  func.func @transform_0(%arg0: i32, %arg1: i32) -> (i32, i32) {
    %c0_i32 = arith.constant 0 : i32
    %c0_i32_0 = arith.constant 0 : i32
    return %c0_i32, %arg0 : i32, i32
  }
  func.func @transform_1(%arg0: i32, %arg1: i32) -> (i32, i32, i32) {
    %c0_i32 = arith.constant 0 : i32
    %c0_i32_0 = arith.constant 0 : i32
    %c0_i32_1 = arith.constant 0 : i32
    %c0_i32_2 = arith.constant 0 : i32
    return %c0_i32, %c0_i32_0, %c0_i32_1 : i32, i32, i32
  }
  func.func @transform_2(%arg0: i32, %arg1: i32) -> (i32, i32, i32) {
    %c0_i32 = arith.constant 0 : i32
    %c0_i32_0 = arith.constant 0 : i32
    %c0_i32_1 = arith.constant 0 : i32
    return %arg1, %c0_i32, %c0_i32_0 : i32, i32, i32
  }
  func.func @transform_3(%arg0: i32, %arg1: i32) -> (i32, i32, i32) {
    %c0_i32 = arith.constant 0 : i32
    %c0_i32_0 = arith.constant 0 : i32
    %c0_i32_1 = arith.constant 0 : i32
    return %arg1, %c0_i32, %c0_i32_0 : i32, i32, i32
  }
  func.func @transform_4(%arg0: i32, %arg1: i32) -> (i32, i32, i32, i32) {
    %c0_i32 = arith.constant 0 : i32
    %c0_i32_0 = arith.constant 0 : i32
    %c0_i32_1 = arith.constant 0 : i32
    %c0_i32_2 = arith.constant 0 : i32
    return %arg1, %c0_i32, %c0_i32_0, %c0_i32_1 : i32, i32, i32, i32
  }
  func.func @transform_5(%arg0: i32, %arg1: i32) -> (i32, i32, i32) {
    %c0_i32 = arith.constant 0 : i32
    %c0_i32_0 = arith.constant 0 : i32
    %c0_i32_1 = arith.constant 0 : i32
    return %arg1, %c0_i32, %c0_i32_0 : i32, i32, i32
  }
  func.func @transform_6(%arg0: i32, %arg1: i32) -> (i32, i32) {
    %c0_i32 = arith.constant 0 : i32
    %c0_i32_0 = arith.constant 0 : i32
    return %c0_i32, %arg0 : i32, i32
  }
}

</mosaic_0001>

<llo_original>
// kernel: residual_block_pallas.1
$region0: #{residual_block_pallas.1}
  #allocation0 [shape = 'u32[]', space=smem, size = 0x4, offset = 0x4, fixed_abs, tag = 'smem constant byte address 0x4 - core index']
  #allocation1 [shape = 'u32[144,128]{1,0:T(1,128)}', space=vmem, size = 0x12000, scoped, tag = 'internal scratch']
  %s0 = inlined_call_operand.vmem [shape: f32[8,512], index: 0, kind: input, shape index: {}, may-alias: {0,6}]
  %s1 = inlined_call_operand.vmem [shape: f32[9,1,256], index: 1, kind: input, shape index: {}]
  %s2 = inlined_call_operand.vmem [shape: f32[2,8,8], index: 2, kind: input, shape index: {}]
  %s3 = inlined_call_operand.vmem [shape: f32[2,8,1], index: 3, kind: input, shape index: {}]
  %s4 = inlined_call_operand.vmem [shape: f32[2,3,8,24], index: 4, kind: input, shape index: {}]
  %s5 = inlined_call_operand.vmem [shape: f32[2,8,1], index: 5, kind: input, shape index: {}]
  %s6 = inlined_call_operand.vmem [shape: f32[8,512], index: 6, kind: output, shape index: {}, may-alias: {0,6}]
  %s7 = sld [smem:[#allocation0]]
  $region61: #{residual_block_pallas.1} parent=0
    _
  %s9 = ssub.s32 1, %s7
  %s10 = scalar_select 0, %s9, %s7
  loop: start=0, step=1, limit=6
  $region2: #{residual_block_pallas.1} parent=0 // loop_pre_header
    _
  $region3: #{residual_block_pallas.1} parent=0 // loop_header
    %s12 = sphi 0, %s16
    %p13 = scmp.ge.s32.totalorder %s12, 6
    %s19 = sphi 0, %s31
    %s20 = sphi 0, %s27
    %s21 = sphi 0, %s19
    %s22 = sphi 0, %s20
    %s23 = sphi 0, %s21
    %s24 = sphi 0, %s22
    %s34 = sphi 0, %s36
    %s37 = sphi 0, %s34
    %s38 = sphi 0, %s37
    %s54 = sphi 0, %s38
    %s58 = sphi 0, %s58
    %s60 = sphi 0, %s58
    %s61 = sphi 0, %s60
    %s75 = sphi 0, %s61
    %s81 = sphi 0, %s83
    %s84 = sphi 0, %s81
    %s85 = sphi 0, %s84
    %s101 = sphi 0, %s85
    %s107 = sphi 0, %s109
    %s110 = sphi 0, %s107
    %s111 = sphi 0, %s110
    %s127 = sphi 0, %s111
    %s133 = sphi 0, %s135
    %s136 = sphi 0, %s133
    %s137 = sphi 0, %s136
    %s153 = sphi 0, %s137
    %s159 = sphi 0, %s161
    %s162 = sphi 0, %s159
    %s163 = sphi 0, %s162
    %s179 = sphi 0, %s163
    %s185 = sphi 0, %s187
    %s188 = sphi 0, %s185
    %s189 = sphi 0, %s188
    %s205 = sphi 0, %s189
  $region4: #{residual_block_pallas.1} parent=0 // loop_header_branch
    %15 = sbr.rel (%p13) target = $region8
  $region5: #{residual_block_pallas.1} parent=0 // loop_body
    %s17 = ssub.s32 %s12, 1
    %s18 = ssub.s32 %s12, 2
    %s25 = sadd.s32 1, %s20
    %p26 = scmp.ge.s32.totalorder %s25, 2
    %s27 = scalar_select %p26, 0, %s25
    %s28 = sadd.s32 1, %s19
    %s29 = scalar_select %p26, %s28, %s19
    %p30 = scmp.ge.s32.totalorder %s29, 2
    %s31 = scalar_select %p30, 0, %s29
    %s32 = ssub.s32 %s19, %s31
    %p33 = scmp.eq.s32.totalorder %s32, 0
    %s35 = sadd.s32 %s34, 1
    %s36 = scalar_select %p33, %s34, %s35
    %p39 = pneg %p33
    %p40 = scmp.eq.s32.totalorder %s12, 3
    %p41 = por %p39, %p40
    %p42 = scmp.ne.s32.totalorder %s34, %s37
    %p43 = scmp.eq.s32.totalorder %s12, 0
    %p44 = por %p42, %p43
    %p45 = scmp.ne.s32.totalorder %s34, %s37
    %p46 = scmp.eq.s32.totalorder %s17, 3
    %p47 = por %p45, %p46
    %p48 = scmp.ne.s32.totalorder %s37, %s38
    %p49 = scmp.eq.s32.totalorder %s17, 0
    %p50 = por %p48, %p49
    %p51 = scmp.ne.s32.totalorder %s37, %s38
    %p52 = scmp.eq.s32.totalorder %s18, 3
    %p53 = por %p51, %p52
    %p55 = scmp.ne.s32.totalorder %s38, %s54
    %p56 = scmp.eq.s32.totalorder %s18, 0
    %p57 = por %p55, %p56
    %s59 = sadd.s32 %s58, 1
    %p62 = scmp.eq.s32.totalorder %s12, 3
    %p63 = scmp.ne.s32.totalorder %s58, %s60
    %p64 = scmp.eq.s32.totalorder %s12, 0
    %p65 = por %p63, %p64
    %p66 = scmp.ne.s32.totalorder %s58, %s60
    %p67 = scmp.eq.s32.totalorder %s17, 3
    %p68 = por %p66, %p67
    %p69 = scmp.ne.s32.totalorder %s60, %s61
    %p70 = scmp.eq.s32.totalorder %s17, 0
    %p71 = por %p69, %p70
    %p72 = scmp.ne.s32.totalorder %s60, %s61
    %p73 = scmp.eq.s32.totalorder %s18, 3
    %p74 = por %p72, %p73
    %p76 = scmp.ne.s32.totalorder %s61, %s75
    %p77 = scmp.eq.s32.totalorder %s18, 0
    %p78 = por %p76, %p77
    %s79 = ssub.s32 %s20, %s27
    %p80 = scmp.eq.s32.totalorder %s79, 0
    %s82 = sadd.s32 %s81, 1
    %s83 = scalar_select %p80, %s81, %s82
    %p86 = pneg %p80
    %p87 = scmp.eq.s32.totalorder %s12, 3
    %p88 = por %p86, %p87
    %p89 = scmp.ne.s32.totalorder %s81, %s84
    %p90 = scmp.eq.s32.totalorder %s12, 0
    %p91 = por %p89, %p90
    %p92 = scmp.ne.s32.totalorder %s81, %s84
    %p93 = scmp.eq.s32.totalorder %s17, 3
    %p94 = por %p92, %p93
    %p95 = scmp.ne.s32.totalorder %s84, %s85
    %p96 = scmp.eq.s32.totalorder %s17, 0
    %p97 = por %p95, %p96
    %p98 = scmp.ne.s32.totalorder %s84, %s85
    %p99 = scmp.eq.s32.totalorder %s18, 3
    %p100 = por %p98, %p99
    %p102 = scmp.ne.s32.totalorder %s85, %s101
    %p103 = scmp.eq.s32.totalorder %s18, 0
    %p104 = por %p102, %p103
    %s105 = ssub.s32 %s20, %s27
    %p106 = scmp.eq.s32.totalorder %s105, 0
    %s108 = sadd.s32 %s107, 1
    %s109 = scalar_select %p106, %s107, %s108
    %p112 = pneg %p106
    %p113 = scmp.eq.s32.totalorder %s12, 3
    %p114 = por %p112, %p113
    %p115 = scmp.ne.s32.totalorder %s107, %s110
    %p116 = scmp.eq.s32.totalorder %s12, 0
    %p117 = por %p115, %p116
    %p118 = scmp.ne.s32.totalorder %s107, %s110
    %p119 = scmp.eq.s32.totalorder %s17, 3
    %p120 = por %p118, %p119
    %p121 = scmp.ne.s32.totalorder %s110, %s111
    %p122 = scmp.eq.s32.totalorder %s17, 0
    %p123 = por %p121, %p122
    %p124 = scmp.ne.s32.totalorder %s110, %s111
    %p125 = scmp.eq.s32.totalorder %s18, 3
    %p126 = por %p124, %p125
    %p128 = scmp.ne.s32.totalorder %s111, %s127
    %p129 = scmp.eq.s32.totalorder %s18, 0
    %p130 = por %p128, %p129
    %s131 = ssub.s32 %s20, %s27
    %p132 = scmp.eq.s32.totalorder %s131, 0
    %s134 = sadd.s32 %s133, 1
    %s135 = scalar_select %p132, %s133, %s134
    %p138 = pneg %p132
    %p139 = scmp.eq.s32.totalorder %s12, 3
    %p140 = por %p138, %p139
    %p141 = scmp.ne.s32.totalorder %s133, %s136
    %p142 = scmp.eq.s32.totalorder %s12, 0
    %p143 = por %p141, %p142
    %p144 = scmp.ne.s32.totalorder %s133, %s136
    %p145 = scmp.eq.s32.totalorder %s17, 3
    %p146 = por %p144, %p145
    %p147 = scmp.ne.s32.totalorder %s136, %s137
    %p148 = scmp.eq.s32.totalorder %s17, 0
    %p149 = por %p147, %p148
    %p150 = scmp.ne.s32.totalorder %s136, %s137
    %p151 = scmp.eq.s32.totalorder %s18, 3
    %p152 = por %p150, %p151
    %p154 = scmp.ne.s32.totalorder %s137, %s153
    %p155 = scmp.eq.s32.totalorder %s18, 0
    %p156 = por %p154, %p155
    %s157 = ssub.s32 %s20, %s27
    %p158 = scmp.eq.s32.totalorder %s157, 0
    %s160 = sadd.s32 %s159, 1
    %s161 = scalar_select %p158, %s159, %s160
    %p164 = pneg %p158
    %p165 = scmp.eq.s32.totalorder %s12, 3
    %p166 = por %p164, %p165
    %p167 = scmp.ne.s32.totalorder %s159, %s162
    %p168 = scmp.eq.s32.totalorder %s12, 0
    %p169 = por %p167, %p168
    %p170 = scmp.ne.s32.totalorder %s159, %s162
    %p171 = scmp.eq.s32.totalorder %s17, 3
    %p172 = por %p170, %p171
    %p173 = scmp.ne.s32.totalorder %s162, %s163
    %p174 = scmp.eq.s32.totalorder %s17, 0
    %p175 = por %p173, %p174
    %p176 = scmp.ne.s32.totalorder %s162, %s163
    %p177 = scmp.eq.s32.totalorder %s18, 3
    %p178 = por %p176, %p177
    %p180 = scmp.ne.s32.totalorder %s163, %s179
    %p181 = scmp.eq.s32.totalorder %s18, 0
    %p182 = por %p180, %p181
    %s183 = ssub.s32 %s19, %s31
    %p184 = scmp.eq.s32.totalorder %s183, 0
    %s186 = sadd.s32 %s185, 1
    %s187 = scalar_select %p184, %s185, %s186
    %p190 = pneg %p184
    %p191 = scmp.eq.s32.totalorder %s12, 3
    %p192 = por %p190, %p191
    %p193 = scmp.ne.s32.totalorder %s185, %s188
    %p194 = scmp.eq.s32.totalorder %s12, 0
    %p195 = por %p193, %p194
    %p196 = scmp.ne.s32.totalorder %s185, %s188
    %p197 = scmp.eq.s32.totalorder %s17, 3
    %p198 = por %p196, %p197
    %p199 = scmp.ne.s32.totalorder %s188, %s189
    %p200 = scmp.eq.s32.totalorder %s17, 0
    %p201 = por %p199, %p200
    %p202 = scmp.ne.s32.totalorder %s188, %s189
    %p203 = scmp.eq.s32.totalorder %s18, 3
    %p204 = por %p202, %p203
    %p206 = scmp.ne.s32.totalorder %s189, %s205
    %p207 = scmp.eq.s32.totalorder %s18, 0
    %p208 = por %p206, %p207
    %p209 = scmp.le.s32.totalorder 1, %s12
    %p210 = scmp.lt.s32.totalorder %s12, 5
    %p211 = pnand %p209, %p210
    %p212 = pneg %p211
    // Predicated region
    $region9: #{residual_block_pallas.1} parent=5 // pred_check
      _
    $region10: #{residual_block_pallas.1} parent=5 // pred_check_branch
      %214 = sbr.rel (%p211) target = $region12
    $region11: #{residual_block_pallas.1} parent=5 // pred_region
      %s215 = ssub.s32 %s12, 1
      // Predicated region
      $region13: #{residual_block_pallas.1} parent=11 // pred_check
        %p216 = pneg %p71
      $region14: #{residual_block_pallas.1} parent=11 // pred_check_branch
        %218 = sbr.rel (%p216) target = $region16
      $region15: #{residual_block_pallas.1} parent=11 // pred_region
        _
      $region16: #{residual_block_pallas.1} parent=11 // pred_fallthru
        _
    $region12: #{residual_block_pallas.1} parent=5 // pred_fallthru
      _
    %p219 = scmp.lt.s32.totalorder %s12, 4
    // Predicated region
    $region17: #{residual_block_pallas.1} parent=5 // pred_check
      %p220 = pneg %p219
    $region18: #{residual_block_pallas.1} parent=5 // pred_check_branch
      %222 = sbr.rel (%p220) target = $region20
    $region19: #{residual_block_pallas.1} parent=5 // pred_region
      // Predicated region
      $region21: #{residual_block_pallas.1} parent=19 // pred_check
        %p223 = pneg %p44
      $region22: #{residual_block_pallas.1} parent=19 // pred_check_branch
        %225 = sbr.rel (%p223) target = $region24
      $region23: #{residual_block_pallas.1} parent=19 // pred_region
        %s226 = smul.u32 2, %s19
        %p227 = scmp.lt.s32.totalorder %s226, 3
        %s228 = scalar_select %p227, %s226, 3
        %s229 = smul.addr %s228, 8
        %s230 = scalar_lea.vmem %s0, %s229
        %s231 = smul.u32 2, %s19
      $region24: #{residual_block_pallas.1} parent=19 // pred_fallthru
        _
      // Predicated region
      $region25: #{residual_block_pallas.1} parent=19 // pred_check
        %p232 = pneg %p91
      $region26: #{residual_block_pallas.1} parent=19 // pred_check_branch
        %234 = sbr.rel (%p232) target = $region28
      $region27: #{residual_block_pallas.1} parent=19 // pred_region
        %p235 = scmp.lt.s32.totalorder %s20, 1
        %s236 = scalar_select %p235, %s20, 1
        %s237 = smul.addr %s236, 8
        %s238 = scalar_lea.vmem %s2, %s237
      $region28: #{residual_block_pallas.1} parent=19 // pred_fallthru
        _
      // Predicated region
      $region29: #{residual_block_pallas.1} parent=19 // pred_check
        %p239 = pneg %p117
      $region30: #{residual_block_pallas.1} parent=19 // pred_check_branch
        %241 = sbr.rel (%p239) target = $region32
      $region31: #{residual_block_pallas.1} parent=19 // pred_region
        %p242 = scmp.lt.s32.totalorder %s20, 1
        %s243 = scalar_select %p242, %s20, 1
        %s244 = smul.addr %s243, 8
        %s245 = scalar_lea.vmem %s3, %s244
      $region32: #{residual_block_pallas.1} parent=19 // pred_fallthru
        _
      // Predicated region
      $region33: #{residual_block_pallas.1} parent=19 // pred_check
        %p246 = pneg %p143
      $region34: #{residual_block_pallas.1} parent=19 // pred_check_branch
        %248 = sbr.rel (%p246) target = $region36
      $region35: #{residual_block_pallas.1} parent=19 // pred_region
        %p249 = scmp.lt.s32.totalorder %s20, 1
        %s250 = scalar_select %p249, %s20, 1
        %s251 = smul.addr %s250, 3
        %s252 = smul.addr %s251, 8
        %s253 = scalar_lea.vmem %s4, %s252
      $region36: #{residual_block_pallas.1} parent=19 // pred_fallthru
        _
      // Predicated region
      $region37: #{residual_block_pallas.1} parent=19 // pred_check
        %p254 = pneg %p169
      $region38: #{residual_block_pallas.1} parent=19 // pred_check_branch
        %256 = sbr.rel (%p254) target = $region40
      $region39: #{residual_block_pallas.1} parent=19 // pred_region
        %p257 = scmp.lt.s32.totalorder %s20, 1
        %s258 = scalar_select %p257, %s20, 1
        %s259 = smul.addr %s258, 8
        %s260 = scalar_lea.vmem %s5, %s259
      $region40: #{residual_block_pallas.1} parent=19 // pred_fallthru
        _
    $region20: #{residual_block_pallas.1} parent=5 // pred_fallthru
      _
    %p261 = scmp.le.s32.totalorder 1, %s12
    %p262 = scmp.lt.s32.totalorder %s12, 5
    %p263 = pnand %p261, %p262
    %p264 = pneg %p263
    // Predicated region
    $region41: #{residual_block_pallas.1} parent=5 // pred_check
      _
    $region42: #{residual_block_pallas.1} parent=5 // pred_check_branch
      %266 = sbr.rel (%p263) target = $region44
    $region43: #{residual_block_pallas.1} parent=5 // pred_region
      %s267 = ssub.s32 %s12, 1
      %s268 = smul.u32 2, %s21
      %p269 = scmp.lt.s32.totalorder %s268, 3
      %s270 = scalar_select %p269, %s268, 3
      %s271 = smul.addr %s270, 8
      %s272 = scalar_lea.vmem %s0, %s271
      %p273 = pneg %p50
      %p274 = pneg %p47
      %p275 = pneg %p71
      %p276 = pneg %p68
      %p277 = scmp.lt.s32.totalorder %s22, 1
      %s278 = scalar_select %p277, %s22, 1
      %s279 = smul.addr %s278, 8
      %s280 = scalar_lea.vmem %s2, %s279
      %p281 = pneg %p97
      %p282 = pneg %p94
      %p283 = scmp.lt.s32.totalorder %s22, 1
      %s284 = scalar_select %p283, %s22, 1
      %s285 = smul.addr %s284, 8
      %s286 = scalar_lea.vmem %s3, %s285
      %p287 = pneg %p123
      %p288 = pneg %p120
      %p289 = scmp.lt.s32.totalorder %s22, 1
      %s290 = scalar_select %p289, %s22, 1
      %s291 = smul.addr %s290, 3
      %s292 = smul.addr %s291, 8
      %s293 = scalar_lea.vmem %s4, %s292
      %p294 = pneg %p149
      %p295 = pneg %p146
      %p296 = scmp.lt.s32.totalorder %s22, 1
      %s297 = scalar_select %p296, %s22, 1
      %s298 = smul.addr %s297, 8
      %s299 = scalar_lea.vmem %s5, %s298
      %p300 = pneg %p175
      %p301 = pneg %p172
      %p302 = pneg %p201
      %p303 = pneg %p198
      %s304 = smul.u32 2, %s21
      %p305 = scmp.lt.s32.totalorder %s304, 3
      %s306 = scalar_select %p305, %s304, 3
      %s307 = smul.addr %s306, 8
      %s308 = scalar_lea.vmem %s6, %s307
      %s309 = smul.u32 2, %s21
      %p310 = scmp.lt.s32.totalorder %s309, 3
      %s311 = scalar_select %p310, %s309, 3
      %s312 = smul.addr %s311, 8
      %s313 = scalar_lea.vmem %s0, %s312
      %s314 = smul.u32 2, %s21
      %p315 = scmp.lt.s32.totalorder %s22, 1
      %s316 = scalar_select %p315, %s22, 1
      %s317 = smul.addr %s316, 8
      %s318 = scalar_lea.vmem %s2, %s317
      %p319 = scmp.lt.s32.totalorder %s22, 1
      %s320 = scalar_select %p319, %s22, 1
      %s321 = smul.addr %s320, 8
      %s322 = scalar_lea.vmem %s3, %s321
      %p323 = scmp.lt.s32.totalorder %s22, 1
      %s324 = scalar_select %p323, %s22, 1
      %s325 = smul.addr %s324, 3
      %s326 = smul.addr %s325, 8
      %s327 = scalar_lea.vmem %s4, %s326
      %p328 = scmp.lt.s32.totalorder %s22, 1
      %s329 = scalar_select %p328, %s22, 1
      %s330 = smul.addr %s329, 8
      %s331 = scalar_lea.vmem %s5, %s330
      %s332 = smul.u32 2, %s21
      %p333 = scmp.lt.s32.totalorder %s332, 3
      %s334 = scalar_select %p333, %s332, 3
      %s335 = smul.addr %s334, 8
      %s336 = scalar_lea.vmem %s6, %s335
      %s337 = smul.u32 2, %s21
      %p338 = scmp.eq.s32.totalorder %s22, 0
      // Predicated region
      $region45: #{residual_block_pallas.1} parent=43 // pred_check
        %p339 = pneg %p338
      $region46: #{residual_block_pallas.1} parent=43 // pred_check_branch
        %341 = sbr.rel (%p339) target = $region48
      $region47: #{residual_block_pallas.1} parent=43 // pred_region
        %v342 = vld [vmem:[%s313] sm:$0xff]
        %v343 = vld [vmem:[%s313 + $0x8] sm:$0xff]
        %344 = vst [vmem:[%s336] sm:$0xff] %v342
        %345 = vst [vmem:[%s336 + $0x8] sm:$0xff] %v343
      $region48: #{residual_block_pallas.1} parent=43 // pred_fallthru
        _
      %v346 = vld [vmem:[%s336] sm:$0xff]
      %v347 = vld [vmem:[%s336 + $0x8] sm:$0xff]
      %v348 = vld [vmem:[%s318] sm:$0xff]
      %v349 = vld [vmem:[%s322] sm:$0xff]
      %351 = vset.pattern.permute.xlu0 0
      %352 = vperm.xlu0 %351, %v349
      %v353 = vpop.permute.xlu0 %352
      %vm355 = vcmask 64512
      %v357 = vsel %vm355, %v348, 0
      %359 = vmatprep.subr.mxu0 0.0
      %360 = vmatpush1.msra.mxu0 0.0
      %361 = vmatprep.subr.mxu0 0.0
      %362 = vmatpush1.msra.mxu0 0.0
      %363 = vmatprep.subr.mxu0 0.0
      %364 = vmatpush1.msra.mxu0 0.0
      %365 = vmatprep.subr.mxu0 0.0
      %366 = vmatpush1.msra.mxu0 0.0
      %367 = vmatprep.subr.mxu0 0.0
      %368 = vmatpush1.msra.mxu0 0.0
      %369 = vmatprep.subr.mxu0 0.0
      %370 = vmatpush1.msra.mxu0 0.0
      %371 = vmatprep.subr.mxu0 0.0
      %372 = vmatpush1.msra.mxu0 0.0
      %373 = vmatprep.subr.mxu0 0.0
      %374 = vmatpush1.msra.mxu0 0.0
      %375 = vmatprep.subr.mxu0 0.0
      %376 = vmatpush1.msra.mxu0 0.0
      %377 = vmatprep.subr.mxu0 0.0
      %378 = vmatpush1.msra.mxu0 0.0
      %379 = vmatprep.subr.mxu0 0.0
      %380 = vmatpush1.msra.mxu0 0.0
      %381 = vmatprep.subr.mxu0 0.0
      %382 = vmatpush1.msra.mxu0 0.0
      %383 = vmatprep.subr.mxu0 0.0
      %384 = vmatpush1.msra.mxu0 0.0
      %385 = vmatprep.subr.mxu0 0.0
      %386 = vmatpush1.msra.mxu0 0.0
      %387 = vmatprep.subr.mxu0 0.0
      %388 = vmatpush1.msra.mxu0 0.0
      %389 = vmatprep.subr.mxu0 %v347
      %390 = vmatpush1.msra.mxu0 %v346
      %391 = vmatprep.subr.mxu0 0.0
      %392 = vmatpush2.msra.mxu0 0.0
      %393 = vmatprep.subr.mxu0 0.0
      %394 = vmatpush2.msra.mxu0 0.0
      %395 = vmatprep.subr.mxu0 0.0
      %396 = vmatpush2.msra.mxu0 0.0
      %397 = vmatprep.subr.mxu0 0.0
      %398 = vmatpush2.msra.mxu0 0.0
      %399 = vmatprep.subr.mxu0 0.0
      %400 = vmatpush2.msra.mxu0 0.0
      %401 = vmatprep.subr.mxu0 0.0
      %402 = vmatpush2.msra.mxu0 0.0
      %403 = vmatprep.subr.mxu0 0.0
      %404 = vmatpush2.msra.mxu0 0.0
      %405 = vmatprep.subr.mxu0 0.0
      %406 = vmatpush2.msra.mxu0 0.0
      %407 = vmatprep.subr.mxu0 0.0
      %408 = vmatpush2.msra.mxu0 0.0
      %409 = vmatprep.subr.mxu0 0.0
      %410 = vmatpush2.msra.mxu0 0.0
      %411 = vmatprep.subr.mxu0 0.0
      %412 = vmatpush2.msra.mxu0 0.0
      %413 = vmatprep.subr.mxu0 0.0
      %414 = vmatpush2.msra.mxu0 0.0
      %415 = vmatprep.subr.mxu0 0.0
      %416 = vmatpush2.msra.mxu0 0.0
      %417 = vmatprep.subr.mxu0 0.0
      %418 = vmatpush2.msra.mxu0 0.0
      %419 = vmatprep.subr.mxu0 0.0
      %420 = vmatpush2.msra.mxu0 0.0
      %421 = vmatprep.subr.mxu0 0.0
      %422 = vmatpush2.msra.mxu0 0.0
      %423 = vmatprep.mubr.f32.mxu0 0.0
      %424 = vmatmul.mubr.f32.gmra.mxu0 %v357
      %v425 = vpop.f32.mrf.mxu0
      %v426 = vadd.f32 %v353, %v425
      %v427 = vpop.f32.mrf.mxu0
      %v428 = vadd.f32 %v353, %v427
      %429 = vdwg.mxu0
      %v430 = vmul.f32 %v426, 0.1
      %v431 = vmul.f32 %v428, 0.1
      %v432 = vmax.f32 %v426, %v430
      %v433 = vmax.f32 %v428, %v431
      %434 = vrot.lane.b32.xlu0 %v432, 17
      %v435 = vpop.permute.xlu0 %434
      %436 = vrot.lane.b32.xlu0 %v433, 17
      %v437 = vpop.permute.xlu0 %436
      %v438 = vlaneseq
      %v439 = vand.u32 %v438, 127
      %vm440 = vcmp.lt.s32.totalorder %v439, 17
      %v441 = vsel %vm440, %v435, %v437
      %v442 = vsel %vm440, %v437, %v435
      %v443 = vld [vmem:[%s1] sm:$0x3]
      %v445 = vlaneseq
      %v446 = vshrl.u32 %v445, 7
      %v447 = vsub.s32 0, %v446
      %v448 = vrot.slane %v443, %v447
      %v449 = vlaneseq
      %v450 = vshrl.u32 %v449, 7
      %v451 = vsub.s32 1, %v450
      %v452 = vrot.slane %v443, %v451
      %v455 = vmul.f32 %v442, %v448
      %v456 = vmul.f32 %v441, %v452
      %457 = vrot.lane.b32.xlu0 %v432, 16
      %v458 = vpop.permute.xlu0 %457
      %459 = vrot.lane.b32.xlu0 %v433, 16
      %v460 = vpop.permute.xlu0 %459
      %vm461 = vcmp.lt.s32.totalorder %v439, 16
      %v462 = vsel %vm461, %v458, %v460
      %v463 = vsel %vm461, %v460, %v458
      %s464 = scalar_lea.vmem %s1, 2
      %v465 = vld [vmem:[%s464] sm:$0x3]
      %v467 = vlaneseq
      %v468 = vshrl.u32 %v467, 7
      %v469 = vsub.s32 0, %v468
      %v470 = vrot.slane %v465, %v469
      %v471 = vlaneseq
      %v472 = vshrl.u32 %v471, 7
      %v473 = vsub.s32 1, %v472
      %v474 = vrot.slane %v465, %v473
      %v477 = vmul.f32 %v463, %v470
      %v478 = vmul.f32 %v462, %v474
      %479 = vrot.lane.b32.xlu0 %v432, 15
      %v480 = vpop.permute.xlu0 %479
      %481 = vrot.lane.b32.xlu0 %v433, 15
      %v482 = vpop.permute.xlu0 %481
      %vm483 = vcmp.lt.s32.totalorder %v439, 15
      %v484 = vsel %vm483, %v480, %v482
      %v485 = vsel %vm483, %v482, %v480
      %s486 = scalar_lea.vmem %s1, 4
      %v487 = vld [vmem:[%s486] sm:$0x3]
      %v489 = vlaneseq
      %v490 = vshrl.u32 %v489, 7
      %v491 = vsub.s32 0, %v490
      %v492 = vrot.slane %v487, %v491
      %v493 = vlaneseq
      %v494 = vshrl.u32 %v493, 7
      %v495 = vsub.s32 1, %v494
      %v496 = vrot.slane %v487, %v495
      %v499 = vmul.f32 %v485, %v492
      %v500 = vmul.f32 %v484, %v496
      %v501 = vld [vmem:[%s327] sm:$0xff]
      %502 = vrot.lane.b32.xlu0 %v432, 1
      %v503 = vpop.permute.xlu0 %502
      %504 = vrot.lane.b32.xlu0 %v433, 1
      %v505 = vpop.permute.xlu0 %504
      %vm506 = vcmp.lt.s32.totalorder %v439, 1
      %v507 = vsel %vm506, %v503, %v505
      %v508 = vsel %vm506, %v505, %v503
      %s509 = scalar_lea.vmem %s1, 6
      %v510 = vld [vmem:[%s509] sm:$0x3]
      %v512 = vlaneseq
      %v513 = vshrl.u32 %v512, 7
      %v514 = vsub.s32 0, %v513
      %v515 = vrot.slane %v510, %v514
      %v516 = vlaneseq
      %v517 = vshrl.u32 %v516, 7
      %v518 = vsub.s32 1, %v517
      %v519 = vrot.slane %v510, %v518
      %v522 = vmul.f32 %v508, %v515
      %v523 = vmul.f32 %v507, %v519
      %524 = vrot.lane.b32.xlu0 %v432, 127
      %v525 = vpop.permute.xlu0 %524
      %526 = vrot.lane.b32.xlu0 %v433, 127
      %v527 = vpop.permute.xlu0 %526
      %vm528 = vcmp.lt.s32.totalorder %v439, 127
      %v529 = vsel %vm528, %v525, %v527
      %v530 = vsel %vm528, %v527, %v525
      %s531 = scalar_lea.vmem %s1, 10
      %v532 = vld [vmem:[%s531] sm:$0x3]
      %v534 = vlaneseq
      %v535 = vshrl.u32 %v534, 7
      %v536 = vsub.s32 0, %v535
      %v537 = vrot.slane %v532, %v536
      %v538 = vlaneseq
      %v539 = vshrl.u32 %v538, 7
      %v540 = vsub.s32 1, %v539
      %v541 = vrot.slane %v532, %v540
      %v544 = vmul.f32 %v529, %v537
      %v545 = vmul.f32 %v530, %v541
      %s546 = scalar_lea.vmem %s327, 8
      %v547 = vld [vmem:[%s546] sm:$0xff]
      %vm548 = vcmask 195584
      %v550 = vsel %vm548, %v547, 0
      %552 = vmatprep.subr.mxu0 0.0
      %553 = vmatpush1.msra.mxu0 0.0
      %554 = vmatprep.subr.mxu0 0.0
      %555 = vmatpush1.msra.mxu0 0.0
      %556 = vmatprep.subr.mxu0 0.0
      %557 = vmatpush1.msra.mxu0 0.0
      %558 = vmatprep.subr.mxu0 0.0
      %559 = vmatpush1.msra.mxu0 0.0
      %560 = vmatprep.subr.mxu0 0.0
      %561 = vmatpush1.msra.mxu0 0.0
      %562 = vmatprep.subr.mxu0 0.0
      %563 = vmatpush1.msra.mxu0 0.0
      %564 = vmatprep.subr.mxu0 0.0
      %565 = vmatpush1.msra.mxu0 0.0
      %566 = vmatprep.subr.mxu0 0.0
      %567 = vmatpush1.msra.mxu0 0.0
      %568 = vmatprep.subr.mxu0 0.0
      %569 = vmatpush1.msra.mxu0 0.0
      %570 = vmatprep.subr.mxu0 0.0
      %571 = vmatpush1.msra.mxu0 0.0
      %572 = vmatprep.subr.mxu0 0.0
      %573 = vmatpush1.msra.mxu0 0.0
      %574 = vmatprep.subr.mxu0 0.0
      %575 = vmatpush1.msra.mxu0 0.0
      %576 = vmatprep.subr.mxu0 0.0
      %577 = vmatpush1.msra.mxu0 0.0
      %578 = vmatprep.subr.mxu0 %v545
      %579 = vmatpush1.msra.mxu0 %v544
      %580 = vmatprep.subr.mxu0 %v433
      %581 = vmatpush1.msra.mxu0 %v432
      %582 = vmatprep.subr.mxu0 %v523
      %583 = vmatpush1.msra.mxu0 %v522
      %584 = vmatprep.subr.mxu0 0.0
      %585 = vmatpush2.msra.mxu0 0.0
      %586 = vmatprep.subr.mxu0 0.0
      %587 = vmatpush2.msra.mxu0 0.0
      %588 = vmatprep.subr.mxu0 0.0
      %589 = vmatpush2.msra.mxu0 0.0
      %590 = vmatprep.subr.mxu0 0.0
      %591 = vmatpush2.msra.mxu0 0.0
      %592 = vmatprep.subr.mxu0 0.0
      %593 = vmatpush2.msra.mxu0 0.0
      %594 = vmatprep.subr.mxu0 0.0
      %595 = vmatpush2.msra.mxu0 0.0
      %596 = vmatprep.subr.mxu0 0.0
      %597 = vmatpush2.msra.mxu0 0.0
      %598 = vmatprep.subr.mxu0 0.0
      %599 = vmatpush2.msra.mxu0 0.0
      %600 = vmatprep.subr.mxu0 0.0
      %601 = vmatpush2.msra.mxu0 0.0
      %602 = vmatprep.subr.mxu0 0.0
      %603 = vmatpush2.msra.mxu0 0.0
      %604 = vmatprep.subr.mxu0 0.0
      %605 = vmatpush2.msra.mxu0 0.0
      %606 = vmatprep.subr.mxu0 0.0
      %607 = vmatpush2.msra.mxu0 0.0
      %608 = vmatprep.subr.mxu0 0.0
      %609 = vmatpush2.msra.mxu0 0.0
      %610 = vmatprep.subr.mxu0 0.0
      %611 = vmatpush2.msra.mxu0 0.0
      %612 = vmatprep.subr.mxu0 0.0
      %613 = vmatpush2.msra.mxu0 0.0
      %614 = vmatprep.subr.mxu0 0.0
      %615 = vmatpush2.msra.mxu0 0.0
      %616 = vmatprep.mubr.f32.mxu0 0.0
      %617 = vmatmul.mubr.f32.gmra.mxu0 %v550
      %v618 = vpop.f32.mrf.mxu0
      %v619 = vadd.f32 0.0, %v618
      %v620 = vpop.f32.mrf.mxu0
      %v621 = vadd.f32 0.0, %v620
      %622 = vdwg.mxu0
      %v624 = vsel %vm548, %v501, 0
      %626 = vmatprep.subr.mxu0 0.0
      %627 = vmatpush1.msra.mxu0 0.0
      %628 = vmatprep.subr.mxu0 0.0
      %629 = vmatpush1.msra.mxu0 0.0
      %630 = vmatprep.subr.mxu0 0.0
      %631 = vmatpush1.msra.mxu0 0.0
      %632 = vmatprep.subr.mxu0 0.0
      %633 = vmatpush1.msra.mxu0 0.0
      %634 = vmatprep.subr.mxu0 0.0
      %635 = vmatpush1.msra.mxu0 0.0
      %636 = vmatprep.subr.mxu0 0.0
      %637 = vmatpush1.msra.mxu0 0.0
      %638 = vmatprep.subr.mxu0 0.0
      %639 = vmatpush1.msra.mxu0 0.0
      %640 = vmatprep.subr.mxu0 0.0
      %641 = vmatpush1.msra.mxu0 0.0
      %642 = vmatprep.subr.mxu0 0.0
      %643 = vmatpush1.msra.mxu0 0.0
      %644 = vmatprep.subr.mxu0 0.0
      %645 = vmatpush1.msra.mxu0 0.0
      %646 = vmatprep.subr.mxu0 0.0
      %647 = vmatpush1.msra.mxu0 0.0
      %648 = vmatprep.subr.mxu0 0.0
      %649 = vmatpush1.msra.mxu0 0.0
      %650 = vmatprep.subr.mxu0 0.0
      %651 = vmatpush1.msra.mxu0 0.0
      %652 = vmatprep.subr.mxu0 %v500
      %653 = vmatpush1.msra.mxu0 %v499
      %654 = vmatprep.subr.mxu0 %v478
      %655 = vmatpush1.msra.mxu0 %v477
      %656 = vmatprep.subr.mxu0 %v456
      %657 = vmatpush1.msra.mxu0 %v455
      %658 = vmatprep.subr.mxu0 0.0
      %659 = vmatpush2.msra.mxu0 0.0
      %660 = vmatprep.subr.mxu0 0.0
      %661 = vmatpush2.msra.mxu0 0.0
      %662 = vmatprep.subr.mxu0 0.0
      %663 = vmatpush2.msra.mxu0 0.0
      %664 = vmatprep.subr.mxu0 0.0
      %665 = vmatpush2.msra.mxu0 0.0
      %666 = vmatprep.subr.mxu0 0.0
      %667 = vmatpush2.msra.mxu0 0.0
      %668 = vmatprep.subr.mxu0 0.0
      %669 = vmatpush2.msra.mxu0 0.0
      %670 = vmatprep.subr.mxu0 0.0
      %671 = vmatpush2.msra.mxu0 0.0
      %672 = vmatprep.subr.mxu0 0.0
      %673 = vmatpush2.msra.mxu0 0.0
      %674 = vmatprep.subr.mxu0 0.0
      %675 = vmatpush2.msra.mxu0 0.0
      %676 = vmatprep.subr.mxu0 0.0
      %677 = vmatpush2.msra.mxu0 0.0
      %678 = vmatprep.subr.mxu0 0.0
      %679 = vmatpush2.msra.mxu0 0.0
      %680 = vmatprep.subr.mxu0 0.0
      %681 = vmatpush2.msra.mxu0 0.0
      %682 = vmatprep.subr.mxu0 0.0
      %683 = vmatpush2.msra.mxu0 0.0
      %684 = vmatprep.subr.mxu0 0.0
      %685 = vmatpush2.msra.mxu0 0.0
      %686 = vmatprep.subr.mxu0 0.0
      %687 = vmatpush2.msra.mxu0 0.0
      %688 = vmatprep.subr.mxu0 0.0
      %689 = vmatpush2.msra.mxu0 0.0
      %690 = vmatprep.mubr.f32.mxu0 0.0
      %691 = vmatmul.mubr.f32.gmra.mxu0 %v624
      %v692 = vpop.f32.mrf.mxu0
      %v693 = vadd.f32 %v619, %v692
      %v694 = vpop.f32.mrf.mxu0
      %v695 = vadd.f32 %v621, %v694
      %696 = vdwg.mxu0
      %697 = vrot.lane.b32.xlu0 %v432, 113
      %v698 = vpop.permute.xlu0 %697
      %699 = vrot.lane.b32.xlu0 %v433, 113
      %v700 = vpop.permute.xlu0 %699
      %vm701 = vcmp.lt.s32.totalorder %v439, 113
      %v702 = vsel %vm701, %v698, %v700
      %v703 = vsel %vm701, %v700, %v698
      %s704 = scalar_lea.vmem %s1, 12
      %v705 = vld [vmem:[%s704] sm:$0x3]
      %v707 = vlaneseq
      %v708 = vshrl.u32 %v707, 7
      %v709 = vsub.s32 0, %v708
      %v710 = vrot.slane %v705, %v709
      %v711 = vlaneseq
      %v712 = vshrl.u32 %v711, 7
      %v713 = vsub.s32 1, %v712
      %v714 = vrot.slane %v705, %v713
      %v717 = vmul.f32 %v702, %v710
      %v718 = vmul.f32 %v703, %v714
      %719 = vrot.lane.b32.xlu0 %v432, 112
      %v720 = vpop.permute.xlu0 %719
      %721 = vrot.lane.b32.xlu0 %v433, 112
      %v722 = vpop.permute.xlu0 %721
      %vm723 = vcmp.lt.s32.totalorder %v439, 112
      %v724 = vsel %vm723, %v720, %v722
      %v725 = vsel %vm723, %v722, %v720
      %s726 = scalar_lea.vmem %s1, 14
      %v727 = vld [vmem:[%s726] sm:$0x3]
      %v729 = vlaneseq
      %v730 = vshrl.u32 %v729, 7
      %v731 = vsub.s32 0, %v730
      %v732 = vrot.slane %v727, %v731
      %v733 = vlaneseq
      %v734 = vshrl.u32 %v733, 7
      %v735 = vsub.s32 1, %v734
      %v736 = vrot.slane %v727, %v735
      %v739 = vmul.f32 %v724, %v732
      %v740 = vmul.f32 %v725, %v736
      %741 = vrot.lane.b32.xlu0 %v432, 111
      %v742 = vpop.permute.xlu0 %741
      %743 = vrot.lane.b32.xlu0 %v433, 111
      %v744 = vpop.permute.xlu0 %743
      %vm745 = vcmp.lt.s32.totalorder %v439, 111
      %v746 = vsel %vm745, %v742, %v744
      %v747 = vsel %vm745, %v744, %v742
      %s748 = scalar_lea.vmem %s1, 16
      %v749 = vld [vmem:[%s748] sm:$0x3]
      %v751 = vlaneseq
      %v752 = vshrl.u32 %v751, 7
      %v753 = vsub.s32 0, %v752
      %v754 = vrot.slane %v749, %v753
      %v755 = vlaneseq
      %v756 = vshrl.u32 %v755, 7
      %v757 = vsub.s32 1, %v756
      %v758 = vrot.slane %v749, %v757
      %v761 = vmul.f32 %v746, %v754
      %v762 = vmul.f32 %v747, %v758
      %s763 = scalar_lea.vmem %s327, 16
      %v764 = vld [vmem:[%s763] sm:$0xff]
      %v766 = vsel %vm548, %v764, 0
      %768 = vmatprep.subr.mxu0 0.0
      %769 = vmatpush1.msra.mxu0 0.0
      %770 = vmatprep.subr.mxu0 0.0
      %771 = vmatpush1.msra.mxu0 0.0
      %772 = vmatprep.subr.mxu0 0.0
      %773 = vmatpush1.msra.mxu0 0.0
      %774 = vmatprep.subr.mxu0 0.0
      %775 = vmatpush1.msra.mxu0 0.0
      %776 = vmatprep.subr.mxu0 0.0
      %777 = vmatpush1.msra.mxu0 0.0
      %778 = vmatprep.subr.mxu0 0.0
      %779 = vmatpush1.msra.mxu0 0.0
      %780 = vmatprep.subr.mxu0 0.0
      %781 = vmatpush1.msra.mxu0 0.0
      %782 = vmatprep.subr.mxu0 0.0
      %783 = vmatpush1.msra.mxu0 0.0
      %784 = vmatprep.subr.mxu0 0.0
      %785 = vmatpush1.msra.mxu0 0.0
      %786 = vmatprep.subr.mxu0 0.0
      %787 = vmatpush1.msra.mxu0 0.0
      %788 = vmatprep.subr.mxu0 0.0
      %789 = vmatpush1.msra.mxu0 0.0
      %790 = vmatprep.subr.mxu0 0.0
      %791 = vmatpush1.msra.mxu0 0.0
      %792 = vmatprep.subr.mxu0 0.0
      %793 = vmatpush1.msra.mxu0 0.0
      %794 = vmatprep.subr.mxu0 %v762
      %795 = vmatpush1.msra.mxu0 %v761
      %796 = vmatprep.subr.mxu0 %v740
      %797 = vmatpush1.msra.mxu0 %v739
      %798 = vmatprep.subr.mxu0 %v718
      %799 = vmatpush1.msra.mxu0 %v717
      %800 = vmatprep.subr.mxu0 0.0
      %801 = vmatpush2.msra.mxu0 0.0
      %802 = vmatprep.subr.mxu0 0.0
      %803 = vmatpush2.msra.mxu0 0.0
      %804 = vmatprep.subr.mxu0 0.0
      %805 = vmatpush2.msra.mxu0 0.0
      %806 = vmatprep.subr.mxu0 0.0
      %807 = vmatpush2.msra.mxu0 0.0
      %808 = vmatprep.subr.mxu0 0.0
      %809 = vmatpush2.msra.mxu0 0.0
      %810 = vmatprep.subr.mxu0 0.0
      %811 = vmatpush2.msra.mxu0 0.0
      %812 = vmatprep.subr.mxu0 0.0
      %813 = vmatpush2.msra.mxu0 0.0
      %814 = vmatprep.subr.mxu0 0.0
      %815 = vmatpush2.msra.mxu0 0.0
      %816 = vmatprep.subr.mxu0 0.0
      %817 = vmatpush2.msra.mxu0 0.0
      %818 = vmatprep.subr.mxu0 0.0
      %819 = vmatpush2.msra.mxu0 0.0
      %820 = vmatprep.subr.mxu0 0.0
      %821 = vmatpush2.msra.mxu0 0.0
      %822 = vmatprep.subr.mxu0 0.0
      %823 = vmatpush2.msra.mxu0 0.0
      %824 = vmatprep.subr.mxu0 0.0
      %825 = vmatpush2.msra.mxu0 0.0
      %826 = vmatprep.subr.mxu0 0.0
      %827 = vmatpush2.msra.mxu0 0.0
      %828 = vmatprep.subr.mxu0 0.0
      %829 = vmatpush2.msra.mxu0 0.0
      %830 = vmatprep.subr.mxu0 0.0
      %831 = vmatpush2.msra.mxu0 0.0
      %832 = vmatprep.mubr.f32.mxu0 0.0
      %833 = vmatmul.mubr.f32.gmra.mxu0 %v766
      %v834 = vpop.f32.mrf.mxu0
      %v835 = vadd.f32 0.0, %v834
      %v836 = vpop.f32.mrf.mxu0
      %v837 = vadd.f32 0.0, %v836
      %838 = vdwg.mxu0
      %v839 = vadd.f32 %v693, %v835
      %v840 = vadd.f32 %v695, %v837
      %v841 = vld [vmem:[%s331] sm:$0xff]
      %843 = vset.pattern.permute.xlu0 0
      %844 = vperm.xlu0 %843, %v841
      %v845 = vpop.permute.xlu0 %844
      %v847 = vadd.f32 %v839, %v845
      %v848 = vadd.f32 %v840, %v845
      %v849 = vmul.f32 %v847, 0.1
      %v850 = vmul.f32 %v848, 0.1
      %v851 = vmax.f32 %v847, %v849
      %v852 = vmax.f32 %v848, %v850
      %v853 = vadd.f32 %v346, %v851
      %v854 = vadd.f32 %v347, %v852
      %855 = vst [vmem:[%s336] sm:$0xff] %v853
      %856 = vst [vmem:[%s336 + $0x8] sm:$0xff] %v854
      %s857 = smul.u32 2, %s21
      %p858 = scmp.lt.s32.totalorder %s857, 3
      %s859 = scalar_select %p858, %s857, 3
      %s860 = smul.addr %s859, 8
      %s861 = scalar_lea.vmem %s6, %s860
      // Predicated region
      $region49: #{residual_block_pallas.1} parent=43 // pred_check
        %p862 = pneg %p198
      $region50: #{residual_block_pallas.1} parent=43 // pred_check_branch
        %864 = sbr.rel (%p862) target = $region52
      $region51: #{residual_block_pallas.1} parent=43 // pred_region
        %s865 = smul.u32 2, %s21
      $region52: #{residual_block_pallas.1} parent=43 // pred_fallthru
        _
    $region44: #{residual_block_pallas.1} parent=5 // pred_fallthru
      _
    %p866 = scmp.le.s32.totalorder 2, %s12
    // Predicated region
    $region53: #{residual_block_pallas.1} parent=5 // pred_check
      %p867 = pneg %p866
    $region54: #{residual_block_pallas.1} parent=5 // pred_check_branch
      %869 = sbr.rel (%p867) target = $region56
    $region55: #{residual_block_pallas.1} parent=5 // pred_region
      %s870 = ssub.s32 %s12, 2
      // Predicated region
      $region57: #{residual_block_pallas.1} parent=55 // pred_check
        %p871 = pneg %p204
      $region58: #{residual_block_pallas.1} parent=55 // pred_check_branch
        %873 = sbr.rel (%p871) target = $region60
      $region59: #{residual_block_pallas.1} parent=55 // pred_region
        %s874 = smul.u32 2, %s23
        %p875 = scmp.lt.s32.totalorder %s874, 3
        %s876 = scalar_select %p875, %s874, 3
        %s877 = smul.addr %s876, 8
        %s878 = scalar_lea.vmem %s6, %s877
      $region60: #{residual_block_pallas.1} parent=55 // pred_fallthru
        _
    $region56: #{residual_block_pallas.1} parent=5 // pred_fallthru
      _
  $region6: #{residual_block_pallas.1} parent=0 // loop_footer
    %s16 = sadd.s32 1, %s12
  $region7: #{residual_block_pallas.1} parent=0 // loop_footer_branch
    %11 = sbr.rel target = $region3
  $region8: #{residual_block_pallas.1} parent=0 // loop_exit
    _

</llo_original>
